<compile_context>
chip_gen: v7x
topology: tpu7x:2x2x1
jax: 0.10.0
libtpu: 0.0.40
codegen_flags: <defaults>
</compile_context>

<pallas_src>
import math

import jax
import jax.numpy as jnp
from jax.experimental import pallas as pl
from jax.experimental.pallas import tpu as pltpu


def build_sincos_pe_2d(d_model: int, seq_len: int, cls_token: bool = False,
                       dtype=jnp.float32) -> jnp.ndarray:
    """Deterministic construction mirroring the PyTorch __init__ exactly.

    Store the table in the activation dtype (dtype=...) so the forward pass never
    has to cast it per call.
    """
    height = width = int(math.sqrt(seq_len))
    assert height * width == seq_len, "seq_len should be a square number"
    if d_model % 4 != 0:
        raise ValueError(
            "Cannot use sin/cos positional encoding with odd dimension "
            f"(got dim={d_model})"
        )
    half = d_model // 2
    div_term = jnp.exp(
        jnp.arange(0.0, half, 2.0, dtype=jnp.float32) * -(math.log(10000.0) / half)
    )
    pos_w = jnp.arange(0.0, width, dtype=jnp.float32)[:, None]   # (W, 1)
    pos_h = jnp.arange(0.0, height, dtype=jnp.float32)[:, None]  # (H, 1)

    sin_w = jnp.sin(pos_w * div_term)  # -> pe[:, :, 0:half:2]
    cos_w = jnp.cos(pos_w * div_term)  # -> pe[:, :, 1:half:2]
    sin_h = jnp.sin(pos_h * div_term)  # -> pe[:, :, half::2]
    cos_h = jnp.cos(pos_h * div_term)  # -> pe[:, :, half+1::2]

    w_part = jnp.stack([sin_w, cos_w], axis=-1).reshape(width, half)   # (W, half)
    h_part = jnp.stack([sin_h, cos_h], axis=-1).reshape(height, half)  # (H, half)

    pe = jnp.concatenate(
        [
            jnp.broadcast_to(w_part[None, :, :], (height, width, half)),
            jnp.broadcast_to(h_part[:, None, :], (height, width, half)),
        ],
        axis=-1,
    ).reshape(height * width, d_model)
    if cls_token:
        pe = jnp.concatenate([jnp.zeros((1, d_model), jnp.float32), pe], axis=0)
    return pe.astype(dtype)


def _add_pe_kernel(x_ref, pe_ref, o_ref):
    # x_ref/o_ref: (1, TR, 128); pe_ref: (TR, 128) -> broadcast add over batch dim.
    o_ref[...] = (x_ref[...] + pe_ref[...]).astype(o_ref.dtype)


def _cdiv(a: int, b: int) -> int:
    return -(-a // b)


def _round_up(n: int, m: int) -> int:
    return _cdiv(n, m) * m


_TILE_CAP_BYTES = 4 * 1024 * 1024      # per-block cap; 1-4 MiB sits on the HBM roofline plateau
_BYPASS_BYTES = 1 * 1024 * 1024        # below this the pallas_call launch dominates the work
_VMEM_LIMIT_BYTES = 40 * 1024 * 1024   # 6 double-buffered ~4 MiB blocks + headroom (< 64 MiB on v7x)


def _choose_row_tile(rows: int, itemsize: int) -> int:
    """Row tile: multiple of the dtype's sublane packing, capped at ~4 MiB, >= 2 tiles if possible."""
    sub = 8 * max(1, 4 // itemsize)            # 8 for f32, 16 for bf16, 32 for int8/fp8
    cap_rows = max(sub, (_TILE_CAP_BYTES // (128 * itemsize)) // sub * sub)
    tr = min(cap_rows, _round_up(rows, sub))
    # Keep >= 2 row tiles so the "parallel" row axis feeds both v7x TensorCores even at B == 1.
    if _cdiv(rows, tr) < 2 and rows > sub:
        tr = max(sub, _round_up(_cdiv(rows, 2), sub))
    return tr


def sincos_pos_embed_forward(x: jnp.ndarray, pe: jnp.ndarray, *,
                             force_pallas: bool = False) -> jnp.ndarray:
    """x: (B, S, D); pe: (S_total >= S, D). Returns x + pe[:S] (broadcast over batch)."""
    B, S, D = x.shape
    assert pe.shape[0] >= S and pe.shape[1] == D
    pe_s = pe if pe.shape[0] == S else pe[:S]
    if pe_s.dtype != x.dtype:
        # Fast path is to pre-store pe in the activation dtype (build_sincos_pe_2d(dtype=...))
        # so this per-call cast (an extra read+write of the whole table) never runs.
        pe_s = pe_s.astype(x.dtype)

    itemsize = jnp.dtype(x.dtype).itemsize
    n = S * D
    if n % 128 != 0:
        # Not lane-alignable; XLA's fused broadcast add is faster for such shapes.
        return x + pe_s[None, :, :]
    if (not force_pallas) and (x.size * itemsize < _BYPASS_BYTES):
        # Tiny tensor: pallas_call launch / pipeline setup dwarfs the actual add.
        return x + pe_s[None, :, :]

    rows = n // 128
    x2 = x.reshape(B, rows, 128)
    pe2 = pe_s.reshape(rows, 128)

    tr = _choose_row_tile(rows, itemsize)
    # Batch axis INNERMOST: pe's block index (r, 0) is unchanged across the inner b loop,
    # so Pallas skips the re-DMA and pe is streamed from HBM exactly once.
    grid = (_cdiv(rows, tr), B)

    out = pl.pallas_call(
        _add_pe_kernel,
        out_shape=jax.ShapeDtypeStruct((B, rows, 128), x.dtype),
        grid_spec=pltpu.PrefetchScalarGridSpec(
            num_scalar_prefetch=0,
            grid=grid,
            in_specs=[
                pl.BlockSpec((1, tr, 128), lambda r, b: (b, r, 0)),
                pl.BlockSpec((tr, 128), lambda r, b: (r, 0)),  # independent of b -> fetched once
            ],
            out_specs=pl.BlockSpec((1, tr, 128), lambda r, b: (b, r, 0)),
        ),
        input_output_aliases={0: 0},   # reuse x's buffer when the caller donates it
        compiler_params=pltpu.CompilerParams(
            dimension_semantics=("parallel", "parallel"),
            vmem_limit_bytes=_VMEM_LIMIT_BYTES,
        ),
    )(x2, pe2)
    return out.reshape(B, S, D)


if __name__ == "__main__":
    # Small shapes consistent with the module: d_model=128, seq_len=64 (8x8 patch grid).
    B, S, D = 2, 64, 128
    pe = build_sincos_pe_2d(d_model=D, seq_len=S, cls_token=False, dtype=jnp.float32)

    key = jax.random.PRNGKey(0)
    x = jax.random.normal(key, (B, S, D), dtype=jnp.float32)

    # f32 path (force the Pallas kernel so it is exercised even at this small size).
    ref = x + pe[:S][None, :, :]
    out = jax.block_until_ready(sincos_pos_embed_forward(x, pe, force_pallas=True))
    assert out.shape == (B, S, D)
    assert jnp.allclose(out, ref, atol=1e-6), "f32 mismatch vs reference"

    # bf16 path: pe pre-stored in the activation dtype at setup -> no per-call cast.
    pe_bf16 = build_sincos_pe_2d(d_model=D, seq_len=S, cls_token=False, dtype=jnp.bfloat16)
    x_bf16 = x.astype(jnp.bfloat16)
    ref_bf16 = (x_bf16 + pe_bf16[:S][None, :, :]).astype(jnp.float32)
    out_bf16 = jax.block_until_ready(
        sincos_pos_embed_forward(x_bf16, pe_bf16, force_pallas=True))
    assert out_bf16.dtype == jnp.bfloat16
    assert jnp.allclose(out_bf16.astype(jnp.float32), ref_bf16,
                        atol=1e-2), "bf16 mismatch vs reference"

    # Auto path: this tiny shape takes the XLA-fused bypass (still correct).
    out_auto = jax.block_until_ready(sincos_pos_embed_forward(x, pe))
    assert jnp.allclose(out_auto, ref, atol=1e-6), "bypass mismatch vs reference"

    print("KERNEL_OK")
</pallas_src>

<mosaic_0001>
module attributes {stable_mosaic.version = 11 : i64} {
  func.func @_add_pe_kernel(%arg0: i32, %arg1: i32, %arg2: memref<1x32x128xf32, #tpu.memory_space<vmem>>, %arg3: memref<32x128xf32, #tpu.memory_space<vmem>>, %arg4: memref<1x32x128xf32, #tpu.memory_space<vmem>>) attributes {dimension_semantics = [#tpu.dimension_semantics<parallel>, #tpu.dimension_semantics<parallel>], iteration_bounds = array<i64: 2, 2>, scalar_prefetch = 0 : i64, scratch_operands = 0 : i64, tpu.core_type = #tpu.core_type<tc>, window_params = [{transform_indices = @transform_0, window_bounds = array<i64: 1, 32, 128>}, {transform_indices = @transform_1, window_bounds = array<i64: 32, 128>}, {transform_indices = @transform_2, window_bounds = array<i64: 1, 32, 128>}]} {
    %c0 = arith.constant 0 : index
    %c0_0 = arith.constant 0 : index
    %c0_1 = arith.constant 0 : index
    %0 = vector.load %arg2[%c0, %c0_0, %c0_1] : memref<1x32x128xf32, #tpu.memory_space<vmem>>, vector<1x32x128xf32>
    %c0_2 = arith.constant 0 : index
    %c0_3 = arith.constant 0 : index
    %1 = vector.load %arg3[%c0_2, %c0_3] : memref<32x128xf32, #tpu.memory_space<vmem>>, vector<32x128xf32>
    %2 = vector.shape_cast %1 : vector<32x128xf32> to vector<1x32x128xf32>
    %3 = arith.addf %0, %2 : vector<1x32x128xf32>
    %c0_4 = arith.constant 0 : index
    %c0_5 = arith.constant 0 : index
    %c0_6 = arith.constant 0 : index
    %4 = vector.load %arg4[%c0_4, %c0_5, %c0_6] : memref<1x32x128xf32, #tpu.memory_space<vmem>>, vector<1x32x128xf32>
    tpu.vector_store %arg4[%c0_4, %c0_5, %c0_6], %3 {strides = array<i32>} : memref<1x32x128xf32, #tpu.memory_space<vmem>>, vector<1x32x128xf32>,
    return
  }
  func.func @transform_0(%arg0: i32, %arg1: i32) -> (i32, i32, i32) {
    %c0_i32 = arith.constant 0 : i32
    %c0_i32_0 = arith.constant 0 : i32
    return %arg1, %arg0, %c0_i32 : i32, i32, i32
  }
  func.func @transform_1(%arg0: i32, %arg1: i32) -> (i32, i32) {
    %c0_i32 = arith.constant 0 : i32
    %c0_i32_0 = arith.constant 0 : i32
    return %arg0, %c0_i32 : i32, i32
  }
  func.func @transform_2(%arg0: i32, %arg1: i32) -> (i32, i32, i32) {
    %c0_i32 = arith.constant 0 : i32
    %c0_i32_0 = arith.constant 0 : i32
    return %arg1, %arg0, %c0_i32 : i32, i32, i32
  }
}

</mosaic_0001>

<llo_original>
// kernel: tpu_custom_call.1
$region0: #{tpu_custom_call.1}
  #allocation0 [shape = 'u32[]', space=smem, size = 0x4, offset = 0x4, fixed_abs, tag = 'smem constant byte address 0x4 - core index']
  #allocation1 [shape = 'u32[144,128]{1,0:T(1,128)}', space=vmem, size = 0x12000, scoped, tag = 'internal scratch']
  %s0 = inlined_call_operand.hbm [shape: f32[2,64,128], index: 0, kind: input, shape index: {}, may-alias: {0,2}]
  %s1 = inlined_call_operand.vmem [shape: f32[64,128], index: 1, kind: input, shape index: {}]
  %s2 = inlined_call_operand.hbm [shape: f32[2,64,128], index: 2, kind: output, shape index: {}, may-alias: {0,2}]
  %s3 = sld [smem:[#allocation0]]
  $region45: #{tpu_custom_call.1} parent=0
    _
  %s5 = ssub.s32 1, %s3
  %s6 = scalar_select 0, %s5, %s3
  $region1: #{tpu_custom_call.1} parent=0
    #allocation2 [shape = 'u8[32768]{0}', space=vmem, size = 0x8000, scoped, tag = 'input window, operand 0']
    #allocation3 [shape = 's32[2]{0}', space=sflag, size = 0x8, scoped, tag = 'scoped memory for tpu_custom_call.1']
    #allocation4 [shape = 's32[2]{0}', space=sflag, size = 0x8, scoped, tag = 'scoped memory for tpu_custom_call.1']
    #allocation5 [shape = 'u8[32768]{0}', space=vmem, size = 0x8000, scoped, tag = 'output window, operand 0']
    %7 = vsyncpa [#allocation3], 0
    %s8 = scalar_lea.sflag [#allocation3], 1
    %9 = vsyncpa %s8, 0
    %10 = vsyncpa [#allocation4], 0
    %s11 = scalar_lea.sflag [#allocation4], 1
    %12 = vsyncpa %s11, 0
    loop: start=0, step=1, limit=6
    $region2: #{tpu_custom_call.1} parent=1 // loop_pre_header
      _
    $region3: #{tpu_custom_call.1} parent=1 // loop_header
      %s14 = sphi 0, %s18
      %p15 = scmp.ge.s32.totalorder %s14, 6
      %s21 = sphi 0, %s33
      %s22 = sphi 0, %s29
      %s23 = sphi 0, %s21
      %s24 = sphi 0, %s22
      %s25 = sphi 0, %s23
      %s26 = sphi 0, %s24
      %s38 = sphi 0, %s40
      %s41 = sphi 0, %s38
      %s42 = sphi 0, %s41
      %s58 = sphi 0, %s42
      %s64 = sphi 0, %s66
      %s67 = sphi 0, %s64
      %s68 = sphi 0, %s67
      %s84 = sphi 0, %s68
      %s92 = sphi 0, %s94
      %s95 = sphi 0, %s92
      %s96 = sphi 0, %s95
      %s112 = sphi 0, %s96
    $region4: #{tpu_custom_call.1} parent=1 // loop_header_branch
      %17 = sbr.rel (%p15) target = $region8
    $region5: #{tpu_custom_call.1} parent=1 // loop_body
      %s19 = ssub.s32 %s14, 1
      %s20 = ssub.s32 %s14, 2
      %s27 = sadd.s32 1, %s22
      %p28 = scmp.ge.s32.totalorder %s27, 2
      %s29 = scalar_select %p28, 0, %s27
      %s30 = sadd.s32 1, %s21
      %s31 = scalar_select %p28, %s30, %s21
      %p32 = scmp.ge.s32.totalorder %s31, 2
      %s33 = scalar_select %p32, 0, %s31
      %s34 = ssub.s32 %s22, %s29
      %s35 = ssub.s32 %s21, %s33
      %s36 = sor.u32 %s34, %s35
      %p37 = scmp.eq.s32.totalorder %s36, 0
      %s39 = sadd.s32 %s38, 1
      %s40 = scalar_select %p37, %s38, %s39
      %p43 = pneg %p37
      %p44 = scmp.eq.s32.totalorder %s14, 3
      %p45 = por %p43, %p44
      %p46 = scmp.ne.s32.totalorder %s38, %s41
      %p47 = scmp.eq.s32.totalorder %s14, 0
      %p48 = por %p46, %p47
      %p49 = scmp.ne.s32.totalorder %s38, %s41
      %p50 = scmp.eq.s32.totalorder %s19, 3
      %p51 = por %p49, %p50
      %p52 = scmp.ne.s32.totalorder %s41, %s42
      %p53 = scmp.eq.s32.totalorder %s19, 0
      %p54 = por %p52, %p53
      %p55 = scmp.ne.s32.totalorder %s41, %s42
      %p56 = scmp.eq.s32.totalorder %s20, 3
      %p57 = por %p55, %p56
      %p59 = scmp.ne.s32.totalorder %s42, %s58
      %p60 = scmp.eq.s32.totalorder %s20, 0
      %p61 = por %p59, %p60
      %s62 = ssub.s32 %s21, %s33
      %p63 = scmp.eq.s32.totalorder %s62, 0
      %s65 = sadd.s32 %s64, 1
      %s66 = scalar_select %p63, %s64, %s65
      %p69 = pneg %p63
      %p70 = scmp.eq.s32.totalorder %s14, 3
      %p71 = por %p69, %p70
      %p72 = scmp.ne.s32.totalorder %s64, %s67
      %p73 = scmp.eq.s32.totalorder %s14, 0
      %p74 = por %p72, %p73
      %p75 = scmp.ne.s32.totalorder %s64, %s67
      %p76 = scmp.eq.s32.totalorder %s19, 3
      %p77 = por %p75, %p76
      %p78 = scmp.ne.s32.totalorder %s67, %s68
      %p79 = scmp.eq.s32.totalorder %s19, 0
      %p80 = por %p78, %p79
      %p81 = scmp.ne.s32.totalorder %s67, %s68
      %p82 = scmp.eq.s32.totalorder %s20, 3
      %p83 = por %p81, %p82
      %p85 = scmp.ne.s32.totalorder %s68, %s84
      %p86 = scmp.eq.s32.totalorder %s20, 0
      %p87 = por %p85, %p86
      %s88 = ssub.s32 %s22, %s29
      %s89 = ssub.s32 %s21, %s33
      %s90 = sor.u32 %s88, %s89
      %p91 = scmp.eq.s32.totalorder %s90, 0
      %s93 = sadd.s32 %s92, 1
      %s94 = scalar_select %p91, %s92, %s93
      %p97 = pneg %p91
      %p98 = scmp.eq.s32.totalorder %s14, 3
      %p99 = por %p97, %p98
      %p100 = scmp.ne.s32.totalorder %s92, %s95
      %p101 = scmp.eq.s32.totalorder %s14, 0
      %p102 = por %p100, %p101
      %p103 = scmp.ne.s32.totalorder %s92, %s95
      %p104 = scmp.eq.s32.totalorder %s19, 3
      %p105 = por %p103, %p104
      %p106 = scmp.ne.s32.totalorder %s95, %s96
      %p107 = scmp.eq.s32.totalorder %s19, 0
      %p108 = por %p106, %p107
      %p109 = scmp.ne.s32.totalorder %s95, %s96
      %p110 = scmp.eq.s32.totalorder %s20, 3
      %p111 = por %p109, %p110
      %p113 = scmp.ne.s32.totalorder %s96, %s112
      %p114 = scmp.eq.s32.totalorder %s20, 0
      %p115 = por %p113, %p114
      %p116 = scmp.le.s32.totalorder 1, %s14
      %p117 = scmp.lt.s32.totalorder %s14, 5
      %p118 = pnand %p116, %p117
      %p119 = pneg %p118
      // Predicated region
      $region9: #{tpu_custom_call.1} parent=5 // pred_check
        _
      $region10: #{tpu_custom_call.1} parent=5 // pred_check_branch
        %121 = sbr.rel (%p118) target = $region12
      $region11: #{tpu_custom_call.1} parent=5 // pred_region
        %s122 = ssub.s32 %s14, 1
      $region12: #{tpu_custom_call.1} parent=5 // pred_fallthru
        _
      %p123 = scmp.lt.s32.totalorder %s14, 4
      // Predicated region
      $region13: #{tpu_custom_call.1} parent=5 // pred_check
        %p124 = pneg %p123
      $region14: #{tpu_custom_call.1} parent=5 // pred_check_branch
        %126 = sbr.rel (%p124) target = $region16
      $region15: #{tpu_custom_call.1} parent=5 // pred_region
        // Predicated region
        $region17: #{tpu_custom_call.1} parent=15 // pred_check
          %p127 = pneg %p48
        $region18: #{tpu_custom_call.1} parent=15 // pred_check_branch
          %129 = sbr.rel (%p127) target = $region20
        $region19: #{tpu_custom_call.1} parent=15 // pred_region
          %s130 = sand.u32 %s38, 1
          %s131 = scalar_lea.sflag [#allocation3], %s130
          %s132 = sand.u32 %s38, 1
          %s133 = smul.addr %s132, 32
          %s134 = scalar_lea.vmem [#allocation2], %s133
          %s135 = smul.u32 4, %s21
          %s137 = ssub.s32 512, 512
          %138 = vsyncadd %s131, %s137
          %s139 = smul.addr %s22, 8
          %s140 = sadd.s32 %s135, %s139
          %s141 = smul.addr %s140, 128
          %s142 = scalar_lea.hbm %s0, %s141
          %s143 = sshll.u32 %s134, 4
          %s144 = int_to_ptr.vmem [resolvable:$true] %s143
          %149 = dma.hbm_to_vmem [thread:$0]  %s142, 512, %s144, %s131, 128, 128, 8
        $region20: #{tpu_custom_call.1} parent=15 // pred_fallthru
          _
        // Predicated region
        $region21: #{tpu_custom_call.1} parent=15 // pred_check
          %p150 = pneg %p74
        $region22: #{tpu_custom_call.1} parent=15 // pred_check_branch
          %152 = sbr.rel (%p150) target = $region24
        $region23: #{tpu_custom_call.1} parent=15 // pred_region
          %s153 = smul.u32 4, %s21
          %p154 = scmp.lt.s32.totalorder %s153, 7
          %s155 = scalar_select %p154, %s153, 7
          %s156 = smul.addr %s155, 8
          %s157 = scalar_lea.vmem %s1, %s156
          %s158 = smul.u32 4, %s21
        $region24: #{tpu_custom_call.1} parent=15 // pred_fallthru
          _
      $region16: #{tpu_custom_call.1} parent=5 // pred_fallthru
        _
      %p159 = scmp.le.s32.totalorder 1, %s14
      %p160 = scmp.lt.s32.totalorder %s14, 5
      %p161 = pnand %p159, %p160
      %p162 = pneg %p161
      // Predicated region
      $region25: #{tpu_custom_call.1} parent=5 // pred_check
        _
      $region26: #{tpu_custom_call.1} parent=5 // pred_check_branch
        %164 = sbr.rel (%p161) target = $region28
      $region27: #{tpu_custom_call.1} parent=5 // pred_region
        %s165 = ssub.s32 %s14, 1
        %s166 = sand.u32 %s41, 1
        %s167 = scalar_lea.sflag [#allocation3], %s166
        %s168 = sand.u32 %s41, 1
        %s169 = smul.addr %s168, 32
        %s170 = scalar_lea.vmem [#allocation2], %s169
        // Predicated region
        $region29: #{tpu_custom_call.1} parent=27 // pred_check
          %p171 = pneg %p54
        $region30: #{tpu_custom_call.1} parent=27 // pred_check_branch
          %173 = sbr.rel (%p171) target = $region32
        $region31: #{tpu_custom_call.1} parent=27 // pred_region
          %174 = dma.done %s167, 512
        $region32: #{tpu_custom_call.1} parent=27 // pred_fallthru
          _
        %s175 = sand.u32 %s41, 1
        %s176 = scalar_lea.sflag [#allocation3], %s175
        %s177 = sand.u32 %s41, 1
        %s178 = smul.addr %s177, 32
        %s179 = scalar_lea.vmem [#allocation2], %s178
        %p180 = pneg %p54
        %p181 = pneg %p51
        %s182 = smul.u32 4, %s23
        %p183 = scmp.lt.s32.totalorder %s182, 7
        %s184 = scalar_select %p183, %s182, 7
        %s185 = smul.addr %s184, 8
        %s186 = scalar_lea.vmem %s1, %s185
        %p187 = pneg %p80
        %p188 = pneg %p77
        %p189 = pneg %p108
        %p190 = pneg %p105
        %s191 = sand.u32 %s95, 1
        %s192 = scalar_lea.sflag [#allocation4], %s191
        %s193 = sand.u32 %s95, 1
        %s194 = smul.addr %s193, 32
        %s195 = scalar_lea.vmem [#allocation5], %s194
        %s196 = smul.u32 4, %s23
        %s197 = smul.u32 4, %s23
        %p198 = scmp.lt.s32.totalorder %s197, 7
        %s199 = scalar_select %p198, %s197, 7
        %s200 = smul.addr %s199, 8
        %s201 = scalar_lea.vmem %s1, %s200
        %s202 = smul.u32 4, %s23
        %s203 = smul.u32 4, %s23
        %v204 = vld [vmem:[%s170] sm:$0xff]
        %v205 = vld [vmem:[%s170 + $0x8] sm:$0xff]
        %v206 = vld [vmem:[%s170 + $0x10] sm:$0xff]
        %v207 = vld [vmem:[%s170 + $0x18] sm:$0xff]
        %v208 = vld [vmem:[%s201] sm:$0xff]
        %v209 = vld [vmem:[%s201 + $0x8] sm:$0xff]
        %v210 = vld [vmem:[%s201 + $0x10] sm:$0xff]
        %v211 = vld [vmem:[%s201 + $0x18] sm:$0xff]
        %v212 = vadd.f32 %v204, %v208
        %v213 = vadd.f32 %v205, %v209
        %v214 = vadd.f32 %v206, %v210
        %v215 = vadd.f32 %v207, %v211
        %216 = vst [vmem:[%s195] sm:$0xff] %v212
        %217 = vst [vmem:[%s195 + $0x8] sm:$0xff] %v213
        %218 = vst [vmem:[%s195 + $0x10] sm:$0xff] %v214
        %219 = vst [vmem:[%s195 + $0x18] sm:$0xff] %v215
        %s220 = sand.u32 %s95, 1
        %s221 = scalar_lea.sflag [#allocation4], %s220
        %s222 = sand.u32 %s95, 1
        %s223 = smul.addr %s222, 32
        %s224 = scalar_lea.vmem [#allocation5], %s223
        // Predicated region
        $region33: #{tpu_custom_call.1} parent=27 // pred_check
          %p225 = pneg %p105
        $region34: #{tpu_custom_call.1} parent=27 // pred_check_branch
          %227 = sbr.rel (%p225) target = $region36
        $region35: #{tpu_custom_call.1} parent=27 // pred_region
          %s228 = smul.u32 4, %s23
          %s230 = ssub.s32 512, 512
          %231 = vsyncadd %s221, %s230
          %s232 = smul.addr %s24, 8
          %s233 = sadd.s32 %s228, %s232
          %s234 = smul.addr %s233, 128
          %s235 = scalar_lea.hbm %s2, %s234
          %s236 = sshll.u32 %s224, 4
          %s237 = int_to_ptr.vmem [resolvable:$true] %s236
          %242 = dma.vmem_to_hbm [thread:$0]  %s237, 512, %s235, %s221, 128, 128, 8
        $region36: #{tpu_custom_call.1} parent=27 // pred_fallthru
          _
      $region28: #{tpu_custom_call.1} parent=5 // pred_fallthru
        _
      %p243 = scmp.le.s32.totalorder 2, %s14
      // Predicated region
      $region37: #{tpu_custom_call.1} parent=5 // pred_check
        %p244 = pneg %p243
      $region38: #{tpu_custom_call.1} parent=5 // pred_check_branch
        %246 = sbr.rel (%p244) target = $region40
      $region39: #{tpu_custom_call.1} parent=5 // pred_region
        %s247 = ssub.s32 %s14, 2
        // Predicated region
        $region41: #{tpu_custom_call.1} parent=39 // pred_check
          %p248 = pneg %p111
        $region42: #{tpu_custom_call.1} parent=39 // pred_check_branch
          %250 = sbr.rel (%p248) target = $region44
        $region43: #{tpu_custom_call.1} parent=39 // pred_region
          %s251 = sand.u32 %s96, 1
          %s252 = scalar_lea.sflag [#allocation4], %s251
          %s253 = sand.u32 %s96, 1
          %s254 = smul.addr %s253, 32
          %s255 = scalar_lea.vmem [#allocation5], %s254
          %256 = dma.done %s252, 512
        $region44: #{tpu_custom_call.1} parent=39 // pred_fallthru
          _
      $region40: #{tpu_custom_call.1} parent=5 // pred_fallthru
        _
    $region6: #{tpu_custom_call.1} parent=1 // loop_footer
      %s18 = sadd.s32 1, %s14
    $region7: #{tpu_custom_call.1} parent=1 // loop_footer_branch
      %13 = sbr.rel target = $region3
    $region8: #{tpu_custom_call.1} parent=1 // loop_exit
      _
    %257 = vsyncpa [#allocation3], 1
    %s258 = scalar_lea.sflag [#allocation3], 1
    %259 = vsyncpa %s258, 1
    %260 = vsyncpa [#allocation4], 1
    %s261 = scalar_lea.sflag [#allocation4], 1
    %262 = vsyncpa %s261, 1

</llo_original>
